<compile_context>
chip_gen: v7x
topology: tpu7x:2x2x1
jax: 0.10.0
libtpu: 0.0.40
codegen_flags: <defaults>
</compile_context>

<pallas_src>
import jax
import jax.numpy as jnp
from jax.experimental import pallas as pl
from jax.experimental.pallas import tpu as pltpu


def _scse_kernel(x_ref, cse_ref, ws_ref, bs_ref, o_ref):
    # x_ref block: (1, C, T) -- channels in sublanes, spatial tile in lanes.
    x = x_ref[0].astype(jnp.float32)                                   # (C, T)

    # ---- sSE branch: 1x1 conv (C -> 1) + sigmoid, per spatial position ----
    s = jnp.dot(ws_ref[...], x, preferred_element_type=jnp.float32)   # (1, T)
    sse = jax.nn.sigmoid(s + bs_ref[0, 0])                            # (1, T)

    # ---- combine with the precomputed cSE gate -----------------------------
    # cse_ref block: (1, C, 1) -> (C, 1); broadcast-add, then single multiply.
    gate = cse_ref[0] + sse                                           # (C, T)
    o_ref[0] = (x * gate).astype(o_ref.dtype)


def _pick_hw_tile(hw, c, elem_bytes, target_bytes=2 * 1024 * 1024):
    """Lane-dense spatial tile: multiple of 128, capped at ~target_bytes/buffer."""
    if hw % 128 != 0:
        # Odd spatial sizes: full extent is always a legal block shape.
        return hw
    t = (target_bytes // (c * elem_bytes)) // 128 * 128
    return int(min(hw, max(128, t)))


def scse_forward(x_nchw, w1, b1, w2, b2, ws, bs):
    """x_nchw: (N, C, H, W). Weights follow PyTorch Conv2d 1x1 shapes (squeezed)."""
    N, C, H, W = x_nchw.shape
    HW = H * W

    # Free reshape on NCHW -> (N, C, HW); HW becomes the lane dimension.
    x = x_nchw.reshape(N, C, HW)

    # ---- cSE gate in plain JAX (O(N*C) work, f32 accumulation) -------------
    f32 = jnp.float32
    mean = jnp.mean(x.astype(f32), axis=2)                               # (N, C)
    h = mean @ w1.astype(f32).T + b1.astype(f32)[None, :]                # (N, Cr)
    h = jnp.where(h > 0, h, 0.01 * h)                                    # LeakyReLU(0.01)
    cse = jax.nn.sigmoid(h @ w2.astype(f32).T + b2.astype(f32)[None, :]) # (N, C)
    cse = cse[:, :, None]                                                # (N, C, 1)

    ws_f = ws.astype(f32)                    # (1, C)  -- PyTorch (out,in) used as-is
    bs_f = bs.astype(f32).reshape(1, 1)      # scalar -> SMEM

    T = _pick_hw_tile(HW, C, x.dtype.itemsize)
    grid = (N, pl.cdiv(HW, T))

    out = pl.pallas_call(
        _scse_kernel,
        out_shape=jax.ShapeDtypeStruct((N, C, HW), x.dtype),
        grid_spec=pltpu.PrefetchScalarGridSpec(
            num_scalar_prefetch=0,
            grid=grid,
            in_specs=[
                pl.BlockSpec((1, C, T), lambda n, t: (n, 0, t)),    # x spatial tile
                pl.BlockSpec((1, C, 1), lambda n, t: (n, 0, 0)),    # precomputed cSE gate
                pl.BlockSpec((1, C), lambda n, t: (0, 0)),          # sSE weight
                pl.BlockSpec(memory_space=pltpu.MemorySpace.SMEM),  # sSE bias (scalar)
            ],
            out_specs=pl.BlockSpec((1, C, T), lambda n, t: (n, 0, t)),
        ),
        compiler_params=pltpu.CompilerParams(
            dimension_semantics=("parallel", "parallel"),
            vmem_limit_bytes=32 * 1024 * 1024,
        ),
    )(x, cse, ws_f, bs_f)

    return out.reshape(N, C, H, W)


def _reference(x, w1, b1, w2, b2, ws, bs):
    # Pure-JAX reference of the PyTorch forward (NCHW).
    mean = jnp.mean(x, axis=(2, 3), keepdims=True)                       # (N,C,1,1)
    h = jnp.einsum("ncij,oc->noij", mean, w1) + b1[None, :, None, None]  # (N,Cr,1,1)
    h = jnp.where(h > 0, h, 0.01 * h)
    cse = jax.nn.sigmoid(
        jnp.einsum("ncij,oc->noij", h, w2) + b2[None, :, None, None]
    )                                                                    # (N,C,1,1)
    sse = jax.nn.sigmoid(
        jnp.einsum("nchw,oc->nohw", x, ws) + bs[None, :, None, None]
    )                                                                    # (N,1,H,W)
    return x * cse + x * sse


if __name__ == "__main__":
    N, C, H, W = 2, 32, 16, 16
    reduction = 16
    Cr = C // reduction  # 2

    key = jax.random.PRNGKey(0)
    k_x, k1, k2, k3, k4, k5, k6 = jax.random.split(key, 7)

    x = jax.random.normal(k_x, (N, C, H, W), dtype=jnp.float32)

    # Deterministic synthetic parameters (PyTorch Conv2d 1x1 weight shapes, squeezed)
    w1 = jax.random.normal(k1, (Cr, C), dtype=jnp.float32) * 0.1   # cSE conv1: C -> Cr
    b1 = jax.random.normal(k2, (Cr,), dtype=jnp.float32) * 0.1
    w2 = jax.random.normal(k3, (C, Cr), dtype=jnp.float32) * 0.1   # cSE conv2: Cr -> C
    b2 = jax.random.normal(k4, (C,), dtype=jnp.float32) * 0.1
    ws = jax.random.normal(k5, (1, C), dtype=jnp.float32) * 0.1    # sSE conv: C -> 1
    bs = jax.random.normal(k6, (1,), dtype=jnp.float32) * 0.1

    out = scse_forward(x, w1, b1, w2, b2, ws, bs)
    out = jax.block_until_ready(out)

    ref = _reference(x, w1, b1, w2, b2, ws, bs)
    assert out.shape == (N, C, H, W)
    assert jnp.allclose(out, ref, atol=1e-5, rtol=1e-5), "mismatch vs reference"

    print("KERNEL_OK")
</pallas_src>

<mosaic_0001>
module attributes {stable_mosaic.version = 11 : i64} {
  func.func @_scse_kernel(%arg0: i32, %arg1: i32, %arg2: memref<1x32x256xf32, #tpu.memory_space<vmem>>, %arg3: memref<1x32x1xf32, #tpu.memory_space<vmem>>, %arg4: memref<1x32xf32, #tpu.memory_space<vmem>>, %arg5: memref<1x1xf32, #tpu.memory_space<smem>>, %arg6: memref<1x32x256xf32, #tpu.memory_space<vmem>>) attributes {dimension_semantics = [#tpu.dimension_semantics<parallel>, #tpu.dimension_semantics<parallel>], iteration_bounds = array<i64: 2, 1>, scalar_prefetch = 0 : i64, scratch_operands = 0 : i64, tpu.core_type = #tpu.core_type<tc>, window_params = [{transform_indices = @transform_0, window_bounds = array<i64: 1, 32, 256>}, {transform_indices = @transform_1, window_bounds = array<i64: 1, 32, 1>}, {pipeline_mode = #tpu.pipeline_mode<synchronous>, transform_indices = @transform_2, window_bounds = array<i64: 1, 32>}, {transform_indices = @transform_3, window_bounds = array<i64: 1, 1>}, {transform_indices = @transform_4, window_bounds = array<i64: 1, 32, 256>}]} {
    %c0 = arith.constant 0 : index
    %c0_0 = arith.constant 0 : index
    %c0_1 = arith.constant 0 : index
    %0 = vector.load %arg2[%c0, %c0_0, %c0_1] : memref<1x32x256xf32, #tpu.memory_space<vmem>>, vector<1x32x256xf32>
    %1 = vector.shape_cast %0 : vector<1x32x256xf32> to vector<32x256xf32>
    %c0_2 = arith.constant 0 : index
    %c0_3 = arith.constant 0 : index
    %2 = vector.load %arg4[%c0_2, %c0_3] : memref<1x32xf32, #tpu.memory_space<vmem>>, vector<1x32xf32>
    %cst = arith.constant dense<0.000000e+00> : vector<1x256xf32>
    %3 = tpu.matmul %2, %1, %cst {dimension_numbers = #tpu.dot_dimension_numbers<[1], [0], [0], [1], [0, 0, 1, 1], [], []>} : vector<1x32xf32>, vector<32x256xf32>, vector<1x256xf32> -> vector<1x256xf32>
    %c0_4 = arith.constant 0 : index
    %c0_5 = arith.constant 0 : index
    %4 = memref.load %arg5[%c0_4, %c0_5] : memref<1x1xf32, #tpu.memory_space<smem>>
    %5 = vector.broadcast %4 : f32 to vector<1x256xf32>
    %6 = arith.addf %3, %5 : vector<1x256xf32>
    %7 = arith.negf %6 : vector<1x256xf32>
    %8 = math.exp %7 : vector<1x256xf32>
    %cst_6 = arith.constant 1.000000e+00 : f32
    %9 = vector.broadcast %cst_6 : f32 to vector<1x256xf32>
    %10 = arith.addf %9, %8 : vector<1x256xf32>
    %11 = arith.divf %9, %10 : vector<1x256xf32>
    %c0_7 = arith.constant 0 : index
    %c0_8 = arith.constant 0 : index
    %c0_9 = arith.constant 0 : index
    %12 = vector.load %arg3[%c0_7, %c0_8, %c0_9] : memref<1x32x1xf32, #tpu.memory_space<vmem>>, vector<1x32x1xf32>
    %13 = vector.shape_cast %12 : vector<1x32x1xf32> to vector<32x1xf32>
    %14 = vector.broadcast %13 : vector<32x1xf32> to vector<32x256xf32>
    %15 = vector.broadcast %11 : vector<1x256xf32> to vector<32x256xf32>
    %16 = arith.addf %14, %15 : vector<32x256xf32>
    %17 = arith.mulf %1, %16 : vector<32x256xf32>
    %c0_10 = arith.constant 0 : index
    %c0_11 = arith.constant 0 : index
    %c0_12 = arith.constant 0 : index
    %18 = vector.load %arg6[%c0_10, %c0_11, %c0_12] : memref<1x32x256xf32, #tpu.memory_space<vmem>>, vector<1x32x256xf32>
    %19 = vector.shape_cast %18 : vector<1x32x256xf32> to vector<32x256xf32>
    %20 = vector.shape_cast %17 : vector<32x256xf32> to vector<1x32x256xf32>
    tpu.vector_store %arg6[%c0_10, %c0_11, %c0_12], %20 {strides = array<i32>} : memref<1x32x256xf32, #tpu.memory_space<vmem>>, vector<1x32x256xf32>,
    return
  }
  func.func @transform_0(%arg0: i32, %arg1: i32) -> (i32, i32, i32) {
    %c0_i32 = arith.constant 0 : i32
    %c0_i32_0 = arith.constant 0 : i32
    return %arg0, %c0_i32, %arg1 : i32, i32, i32
  }
  func.func @transform_1(%arg0: i32, %arg1: i32) -> (i32, i32, i32) {
    %c0_i32 = arith.constant 0 : i32
    %c0_i32_0 = arith.constant 0 : i32
    %c0_i32_1 = arith.constant 0 : i32
    return %arg0, %c0_i32, %c0_i32_0 : i32, i32, i32
  }
  func.func @transform_2(%arg0: i32, %arg1: i32) -> (i32, i32) {
    %c0_i32 = arith.constant 0 : i32
    %c0_i32_0 = arith.constant 0 : i32
    %c0_i32_1 = arith.constant 0 : i32
    return %c0_i32, %c0_i32_0 : i32, i32
  }
  func.func @transform_3(%arg0: i32, %arg1: i32) -> (i32, i32) {
    %c0_i32 = arith.constant 0 : i32
    %c0_i32_0 = arith.constant 0 : i32
    %c0_i32_1 = arith.constant 0 : i32
    return %c0_i32, %c0_i32_0 : i32, i32
  }
  func.func @transform_4(%arg0: i32, %arg1: i32) -> (i32, i32, i32) {
    %c0_i32 = arith.constant 0 : i32
    %c0_i32_0 = arith.constant 0 : i32
    return %arg0, %c0_i32, %arg1 : i32, i32, i32
  }
}

</mosaic_0001>

<llo_original>
// kernel: tpu_custom_call.1
$region0: #{tpu_custom_call.1}
  #allocation0 [shape = 'u32[]', space=smem, size = 0x4, offset = 0x4, fixed_abs, tag = 'smem constant byte address 0x4 - core index']
  #allocation1 [shape = 'u32[144,128]{1,0:T(1,128)}', space=vmem, size = 0x12000, scoped, tag = 'internal scratch']
  #allocation2 [shape = 'f32[1,1]{1,0:T(1,128)S(6)}', space=smem, size = 0x200, scoped, tag = 'scoped memory for tpu_custom_call.1']
  %s0 = inlined_call_operand.hbm [shape: f32[2,32,256], index: 0, kind: input, shape index: {}]
  %s1 = inlined_call_operand.vmem [shape: f32[2,32,1], index: 1, kind: input, shape index: {}]
  %s2 = inlined_call_operand.vmem [shape: f32[1,32], index: 2, kind: input, shape index: {}]
  %s3 = inlined_call_operand.<no memory space> [shape: f32[1,1], index: 3, kind: input, shape index: {}]
  %s4 = inlined_call_operand.hbm [shape: f32[2,32,256], index: 4, kind: output, shape index: {}]
  %s5 = sld [smem:[#allocation0]]
  $region53: #{tpu_custom_call.1} parent=0
    _
  %s7 = ssub.s32 1, %s5
  %s8 = scalar_select 0, %s7, %s5
  %9 = sst [smem:[#allocation2]] %s3
  $region1: #{tpu_custom_call.1} parent=0
    #allocation3 [shape = 'u8[65536]{0}', space=vmem, size = 0x10000, scoped, tag = 'input window, operand 0']
    #allocation4 [shape = 's32[2]{0}', space=sflag, size = 0x8, scoped, tag = 'scoped memory for tpu_custom_call.1']
    #allocation5 [shape = 's32[2]{0}', space=sflag, size = 0x8, scoped, tag = 'scoped memory for tpu_custom_call.1']
    #allocation6 [shape = 'u8[65536]{0}', space=vmem, size = 0x10000, scoped, tag = 'output window, operand 0']
    %10 = vsyncpa [#allocation4], 0
    %s11 = scalar_lea.sflag [#allocation4], 1
    %12 = vsyncpa %s11, 0
    %13 = vsyncpa [#allocation5], 0
    %s14 = scalar_lea.sflag [#allocation5], 1
    %15 = vsyncpa %s14, 0
    loop: start=0, step=1, limit=4
    $region2: #{tpu_custom_call.1} parent=1 // loop_pre_header
      _
    $region3: #{tpu_custom_call.1} parent=1 // loop_header
      %s17 = sphi 0, %s21
      %p18 = scmp.ge.s32.totalorder %s17, 4
      %s24 = sphi 0, %s36
      %s25 = sphi 0, %s32
      %s26 = sphi 0, %s24
      %s27 = sphi 0, %s25
      %s28 = sphi 0, %s26
      %s29 = sphi 0, %s27
      %s41 = sphi 0, %s43
      %s44 = sphi 0, %s41
      %s45 = sphi 0, %s44
      %s61 = sphi 0, %s45
      %s67 = sphi 0, %s69
      %s70 = sphi 0, %s67
      %s71 = sphi 0, %s70
      %s87 = sphi 0, %s71
      %s91 = sphi 0, %s91
      %s93 = sphi 0, %s91
      %s94 = sphi 0, %s93
      %s108 = sphi 0, %s94
      %s112 = sphi 0, %s112
      %s114 = sphi 0, %s112
      %s115 = sphi 0, %s114
      %s129 = sphi 0, %s115
      %s137 = sphi 0, %s139
      %s140 = sphi 0, %s137
      %s141 = sphi 0, %s140
      %s157 = sphi 0, %s141
    $region4: #{tpu_custom_call.1} parent=1 // loop_header_branch
      %20 = sbr.rel (%p18) target = $region8
    $region5: #{tpu_custom_call.1} parent=1 // loop_body
      %s22 = ssub.s32 %s17, 1
      %s23 = ssub.s32 %s17, 2
      %s30 = sadd.s32 1, %s25
      %p31 = scmp.ge.s32.totalorder %s30, 1
      %s32 = scalar_select %p31, 0, %s30
      %s33 = sadd.s32 1, %s24
      %s34 = scalar_select %p31, %s33, %s24
      %p35 = scmp.ge.s32.totalorder %s34, 2
      %s36 = scalar_select %p35, 0, %s34
      %s37 = ssub.s32 %s24, %s36
      %s38 = ssub.s32 %s25, %s32
      %s39 = sor.u32 %s37, %s38
      %p40 = scmp.eq.s32.totalorder %s39, 0
      %s42 = sadd.s32 %s41, 1
      %s43 = scalar_select %p40, %s41, %s42
      %p46 = pneg %p40
      %p47 = scmp.eq.s32.totalorder %s17, 1
      %p48 = por %p46, %p47
      %p49 = scmp.ne.s32.totalorder %s41, %s44
      %p50 = scmp.eq.s32.totalorder %s17, 0
      %p51 = por %p49, %p50
      %p52 = scmp.ne.s32.totalorder %s41, %s44
      %p53 = scmp.eq.s32.totalorder %s22, 1
      %p54 = por %p52, %p53
      %p55 = scmp.ne.s32.totalorder %s44, %s45
      %p56 = scmp.eq.s32.totalorder %s22, 0
      %p57 = por %p55, %p56
      %p58 = scmp.ne.s32.totalorder %s44, %s45
      %p59 = scmp.eq.s32.totalorder %s23, 1
      %p60 = por %p58, %p59
      %p62 = scmp.ne.s32.totalorder %s45, %s61
      %p63 = scmp.eq.s32.totalorder %s23, 0
      %p64 = por %p62, %p63
      %s65 = ssub.s32 %s24, %s36
      %p66 = scmp.eq.s32.totalorder %s65, 0
      %s68 = sadd.s32 %s67, 1
      %s69 = scalar_select %p66, %s67, %s68
      %p72 = pneg %p66
      %p73 = scmp.eq.s32.totalorder %s17, 1
      %p74 = por %p72, %p73
      %p75 = scmp.ne.s32.totalorder %s67, %s70
      %p76 = scmp.eq.s32.totalorder %s17, 0
      %p77 = por %p75, %p76
      %p78 = scmp.ne.s32.totalorder %s67, %s70
      %p79 = scmp.eq.s32.totalorder %s22, 1
      %p80 = por %p78, %p79
      %p81 = scmp.ne.s32.totalorder %s70, %s71
      %p82 = scmp.eq.s32.totalorder %s22, 0
      %p83 = por %p81, %p82
      %p84 = scmp.ne.s32.totalorder %s70, %s71
      %p85 = scmp.eq.s32.totalorder %s23, 1
      %p86 = por %p84, %p85
      %p88 = scmp.ne.s32.totalorder %s71, %s87
      %p89 = scmp.eq.s32.totalorder %s23, 0
      %p90 = por %p88, %p89
      %s92 = sadd.s32 %s91, 1
      %p95 = scmp.eq.s32.totalorder %s17, 1
      %p96 = scmp.ne.s32.totalorder %s91, %s93
      %p97 = scmp.eq.s32.totalorder %s17, 0
      %p98 = por %p96, %p97
      %p99 = scmp.ne.s32.totalorder %s91, %s93
      %p100 = scmp.eq.s32.totalorder %s22, 1
      %p101 = por %p99, %p100
      %p102 = scmp.ne.s32.totalorder %s93, %s94
      %p103 = scmp.eq.s32.totalorder %s22, 0
      %p104 = por %p102, %p103
      %p105 = scmp.ne.s32.totalorder %s93, %s94
      %p106 = scmp.eq.s32.totalorder %s23, 1
      %p107 = por %p105, %p106
      %p109 = scmp.ne.s32.totalorder %s94, %s108
      %p110 = scmp.eq.s32.totalorder %s23, 0
      %p111 = por %p109, %p110
      %s113 = sadd.s32 %s112, 1
      %p116 = scmp.eq.s32.totalorder %s17, 1
      %p117 = scmp.ne.s32.totalorder %s112, %s114
      %p118 = scmp.eq.s32.totalorder %s17, 0
      %p119 = por %p117, %p118
      %p120 = scmp.ne.s32.totalorder %s112, %s114
      %p121 = scmp.eq.s32.totalorder %s22, 1
      %p122 = por %p120, %p121
      %p123 = scmp.ne.s32.totalorder %s114, %s115
      %p124 = scmp.eq.s32.totalorder %s22, 0
      %p125 = por %p123, %p124
      %p126 = scmp.ne.s32.totalorder %s114, %s115
      %p127 = scmp.eq.s32.totalorder %s23, 1
      %p128 = por %p126, %p127
      %p130 = scmp.ne.s32.totalorder %s115, %s129
      %p131 = scmp.eq.s32.totalorder %s23, 0
      %p132 = por %p130, %p131
      %s133 = ssub.s32 %s24, %s36
      %s134 = ssub.s32 %s25, %s32
      %s135 = sor.u32 %s133, %s134
      %p136 = scmp.eq.s32.totalorder %s135, 0
      %s138 = sadd.s32 %s137, 1
      %s139 = scalar_select %p136, %s137, %s138
      %p142 = pneg %p136
      %p143 = scmp.eq.s32.totalorder %s17, 1
      %p144 = por %p142, %p143
      %p145 = scmp.ne.s32.totalorder %s137, %s140
      %p146 = scmp.eq.s32.totalorder %s17, 0
      %p147 = por %p145, %p146
      %p148 = scmp.ne.s32.totalorder %s137, %s140
      %p149 = scmp.eq.s32.totalorder %s22, 1
      %p150 = por %p148, %p149
      %p151 = scmp.ne.s32.totalorder %s140, %s141
      %p152 = scmp.eq.s32.totalorder %s22, 0
      %p153 = por %p151, %p152
      %p154 = scmp.ne.s32.totalorder %s140, %s141
      %p155 = scmp.eq.s32.totalorder %s23, 1
      %p156 = por %p154, %p155
      %p158 = scmp.ne.s32.totalorder %s141, %s157
      %p159 = scmp.eq.s32.totalorder %s23, 0
      %p160 = por %p158, %p159
      %p161 = scmp.le.s32.totalorder 1, %s17
      %p162 = scmp.lt.s32.totalorder %s17, 3
      %p163 = pnand %p161, %p162
      %p164 = pneg %p163
      // Predicated region
      $region9: #{tpu_custom_call.1} parent=5 // pred_check
        _
      $region10: #{tpu_custom_call.1} parent=5 // pred_check_branch
        %166 = sbr.rel (%p163) target = $region12
      $region11: #{tpu_custom_call.1} parent=5 // pred_region
        %s167 = ssub.s32 %s17, 1
        // Predicated region
        $region13: #{tpu_custom_call.1} parent=11 // pred_check
          %p168 = pneg %p104
        $region14: #{tpu_custom_call.1} parent=11 // pred_check_branch
          %170 = sbr.rel (%p168) target = $region16
        $region15: #{tpu_custom_call.1} parent=11 // pred_region
          _
        $region16: #{tpu_custom_call.1} parent=11 // pred_fallthru
          _
        // Predicated region
        $region17: #{tpu_custom_call.1} parent=11 // pred_check
          %p171 = pneg %p125
        $region18: #{tpu_custom_call.1} parent=11 // pred_check_branch
          %173 = sbr.rel (%p171) target = $region20
        $region19: #{tpu_custom_call.1} parent=11 // pred_region
          _
        $region20: #{tpu_custom_call.1} parent=11 // pred_fallthru
          _
      $region12: #{tpu_custom_call.1} parent=5 // pred_fallthru
        _
      %p174 = scmp.lt.s32.totalorder %s17, 2
      // Predicated region
      $region21: #{tpu_custom_call.1} parent=5 // pred_check
        %p175 = pneg %p174
      $region22: #{tpu_custom_call.1} parent=5 // pred_check_branch
        %177 = sbr.rel (%p175) target = $region24
      $region23: #{tpu_custom_call.1} parent=5 // pred_region
        // Predicated region
        $region25: #{tpu_custom_call.1} parent=23 // pred_check
          %p178 = pneg %p51
        $region26: #{tpu_custom_call.1} parent=23 // pred_check_branch
          %180 = sbr.rel (%p178) target = $region28
        $region27: #{tpu_custom_call.1} parent=23 // pred_region
          %s181 = sand.u32 %s41, 1
          %s182 = scalar_lea.sflag [#allocation4], %s181
          %s183 = sand.u32 %s41, 1
          %s184 = smul.addr %s183, 64
          %s185 = scalar_lea.vmem [#allocation3], %s184
          %s186 = smul.u32 2, %s25
          %s188 = ssub.s32 1024, 1024
          %189 = vsyncadd %s182, %s188
          %s190 = smul.addr %s24, 8
          %s191 = sadd.s32 %s186, %s190
          %s192 = smul.addr %s191, 128
          %s193 = scalar_lea.hbm %s0, %s192
          %s194 = sshll.u32 %s185, 4
          %s195 = int_to_ptr.vmem [resolvable:$true] %s194
          %200 = dma.hbm_to_vmem [thread:$0]  %s193, 1024, %s195, %s182, 256, 256, 16
        $region28: #{tpu_custom_call.1} parent=23 // pred_fallthru
          _
        // Predicated region
        $region29: #{tpu_custom_call.1} parent=23 // pred_check
          %p201 = pneg %p77
        $region30: #{tpu_custom_call.1} parent=23 // pred_check_branch
          %203 = sbr.rel (%p201) target = $region32
        $region31: #{tpu_custom_call.1} parent=23 // pred_region
          %p204 = scmp.lt.s32.totalorder %s24, 1
          %s205 = scalar_select %p204, %s24, 1
          %s206 = smul.addr %s205, 4
          %s207 = smul.addr %s206, 8
          %s208 = scalar_lea.vmem %s1, %s207
        $region32: #{tpu_custom_call.1} parent=23 // pred_fallthru
          _
      $region24: #{tpu_custom_call.1} parent=5 // pred_fallthru
        _
      %p209 = scmp.le.s32.totalorder 1, %s17
      %p210 = scmp.lt.s32.totalorder %s17, 3
      %p211 = pnand %p209, %p210
      %p212 = pneg %p211
      // Predicated region
      $region33: #{tpu_custom_call.1} parent=5 // pred_check
        _
      $region34: #{tpu_custom_call.1} parent=5 // pred_check_branch
        %214 = sbr.rel (%p211) target = $region36
      $region35: #{tpu_custom_call.1} parent=5 // pred_region
        %s215 = ssub.s32 %s17, 1
        %s216 = sand.u32 %s44, 1
        %s217 = scalar_lea.sflag [#allocation4], %s216
        %s218 = sand.u32 %s44, 1
        %s219 = smul.addr %s218, 64
        %s220 = scalar_lea.vmem [#allocation3], %s219
        // Predicated region
        $region37: #{tpu_custom_call.1} parent=35 // pred_check
          %p221 = pneg %p57
        $region38: #{tpu_custom_call.1} parent=35 // pred_check_branch
          %223 = sbr.rel (%p221) target = $region40
        $region39: #{tpu_custom_call.1} parent=35 // pred_region
          %224 = dma.done %s217, 1024
        $region40: #{tpu_custom_call.1} parent=35 // pred_fallthru
          _
        %s225 = sand.u32 %s44, 1
        %s226 = scalar_lea.sflag [#allocation4], %s225
        %s227 = sand.u32 %s44, 1
        %s228 = smul.addr %s227, 64
        %s229 = scalar_lea.vmem [#allocation3], %s228
        %p230 = pneg %p57
        %p231 = pneg %p54
        %p232 = scmp.lt.s32.totalorder %s26, 1
        %s233 = scalar_select %p232, %s26, 1
        %s234 = smul.addr %s233, 4
        %s235 = smul.addr %s234, 8
        %s236 = scalar_lea.vmem %s1, %s235
        %p237 = pneg %p83
        %p238 = pneg %p80
        %p239 = pneg %p104
        %p240 = pneg %p101
        %p241 = pneg %p125
        %p242 = pneg %p122
        %p243 = pneg %p153
        %p244 = pneg %p150
        %s245 = sand.u32 %s140, 1
        %s246 = scalar_lea.sflag [#allocation5], %s245
        %s247 = sand.u32 %s140, 1
        %s248 = smul.addr %s247, 64
        %s249 = scalar_lea.vmem [#allocation6], %s248
        %s250 = smul.u32 2, %s27
        %p251 = scmp.lt.s32.totalorder %s26, 1
        %s252 = scalar_select %p251, %s26, 1
        %s253 = smul.addr %s252, 4
        %s254 = smul.addr %s253, 8
        %s255 = scalar_lea.vmem %s1, %s254
        %s256 = smul.u32 2, %s27
        %v257 = vld [vmem:[%s220] sm:$0xff]
        %v258 = vld [vmem:[%s220 + $0x8] sm:$0xff]
        %v259 = vld [vmem:[%s220 + $0x10] sm:$0xff]
        %v260 = vld [vmem:[%s220 + $0x18] sm:$0xff]
        %v261 = vld [vmem:[%s220 + $0x20] sm:$0xff]
        %v262 = vld [vmem:[%s220 + $0x28] sm:$0xff]
        %v263 = vld [vmem:[%s220 + $0x30] sm:$0xff]
        %v264 = vld [vmem:[%s220 + $0x38] sm:$0xff]
        %v265 = vld [vmem:[%s2] sm:$0x1]
        %s266 = sld [smem:[#allocation2]]
        %v267 = vstv %s266
        %vm268 = vcmask 261120
        %v270 = vsel %vm268, %v265, 0
        %272 = vmatprep.subr.mxu0 %v258
        %273 = vmatpush1.msra.mxu0 %v257
        %274 = vmatprep.subr.mxu0 %v260
        %275 = vmatpush1.msra.mxu0 %v259
        %276 = vmatprep.subr.mxu0 %v262
        %277 = vmatpush1.msra.mxu0 %v261
        %278 = vmatprep.subr.mxu0 %v264
        %279 = vmatpush1.msra.mxu0 %v263
        %280 = vmatprep.subr.mxu0 0.0
        %281 = vmatpush1.msra.mxu0 0.0
        %282 = vmatprep.subr.mxu0 0.0
        %283 = vmatpush1.msra.mxu0 0.0
        %284 = vmatprep.subr.mxu0 0.0
        %285 = vmatpush1.msra.mxu0 0.0
        %286 = vmatprep.subr.mxu0 0.0
        %287 = vmatpush1.msra.mxu0 0.0
        %288 = vmatprep.subr.mxu0 0.0
        %289 = vmatpush1.msra.mxu0 0.0
        %290 = vmatprep.subr.mxu0 0.0
        %291 = vmatpush1.msra.mxu0 0.0
        %292 = vmatprep.subr.mxu0 0.0
        %293 = vmatpush1.msra.mxu0 0.0
        %294 = vmatprep.subr.mxu0 0.0
        %295 = vmatpush1.msra.mxu0 0.0
        %296 = vmatprep.subr.mxu0 0.0
        %297 = vmatpush1.msra.mxu0 0.0
        %298 = vmatprep.subr.mxu0 0.0
        %299 = vmatpush1.msra.mxu0 0.0
        %300 = vmatprep.subr.mxu0 0.0
        %301 = vmatpush1.msra.mxu0 0.0
        %302 = vmatprep.subr.mxu0 0.0
        %303 = vmatpush1.msra.mxu0 0.0
        %304 = vmatprep.subr.mxu0 0.0
        %305 = vmatpush1.msra.mxu0 0.0
        %306 = vmatprep.subr.mxu0 0.0
        %307 = vmatpush1.msra.mxu0 0.0
        %308 = vmatprep.subr.mxu0 0.0
        %309 = vmatpush1.msra.mxu0 0.0
        %310 = vmatprep.subr.mxu0 0.0
        %311 = vmatpush1.msra.mxu0 0.0
        %312 = vmatprep.subr.mxu0 0.0
        %313 = vmatpush1.msra.mxu0 0.0
        %314 = vmatprep.subr.mxu0 0.0
        %315 = vmatpush1.msra.mxu0 0.0
        %316 = vmatprep.subr.mxu0 0.0
        %317 = vmatpush1.msra.mxu0 0.0
        %318 = vmatprep.subr.mxu0 0.0
        %319 = vmatpush1.msra.mxu0 0.0
        %320 = vmatprep.subr.mxu0 0.0
        %321 = vmatpush1.msra.mxu0 0.0
        %322 = vmatprep.subr.mxu0 0.0
        %323 = vmatpush1.msra.mxu0 0.0
        %324 = vmatprep.subr.mxu0 0.0
        %325 = vmatpush1.msra.mxu0 0.0
        %326 = vmatprep.subr.mxu0 0.0
        %327 = vmatpush1.msra.mxu0 0.0
        %328 = vmatprep.subr.mxu0 0.0
        %329 = vmatpush1.msra.mxu0 0.0
        %330 = vmatprep.subr.mxu0 0.0
        %331 = vmatpush1.msra.mxu0 0.0
        %332 = vmatprep.subr.mxu0 0.0
        %333 = vmatpush1.msra.mxu0 0.0
        %334 = vmatprep.subr.mxu0 0.0
        %335 = vmatpush1.msra.mxu0 0.0
        %336 = vmatprep.mubr.f32.mxu0 0.0
        %337 = vmatmul.mubr.f32.gmra.mrb[0].mxu0 %v270
        %v338 = vpop.f32.mrb[0].mxu0
        %v339 = vadd.f32 %v267, %v338
        %v340 = vpop.f32.mrb[0].mxu0
        %v341 = vadd.f32 %v267, %v340
        %342 = vdwg.mxu0
        %v343 = vxor.u32 %v339, 2147483648
        %v344 = vxor.u32 %v341, 2147483648
        %v345 = vmul.f32 %v343, 1.442695
        %v346 = vpow.pop %v345
        %v347 = vmul.f32 %v344, 1.442695
        %v348 = vpow.pop %v347
        %v349 = vadd.f32 %v346, 1.0
        %v350 = vadd.f32 %v348, 1.0
        %v351 = vrcp.pop %v349
        %v352 = vmul.f32 1.0, %v351
        %v353 = vrcp.pop %v350
        %v354 = vmul.f32 1.0, %v353
        %v355 = vld [vmem:[%s255] sm:$0xff]
        %v356 = vld [vmem:[%s255 + $0x8] sm:$0xff]
        %v357 = vld [vmem:[%s255 + $0x10] sm:$0xff]
        %v358 = vld [vmem:[%s255 + $0x18] sm:$0xff]
        %360 = vset.pattern.permute.xlu0 0
        %361 = vperm.xlu0 %360, %v355
        %v362 = vpop.permute.xlu0 %361
        %365 = vset.pattern.permute.xlu0 0
        %366 = vperm.xlu0 %365, %v356
        %v367 = vpop.permute.xlu0 %366
        %370 = vset.pattern.permute.xlu0 0
        %371 = vperm.xlu0 %370, %v357
        %v372 = vpop.permute.xlu0 %371
        %375 = vset.pattern.permute.xlu0 0
        %376 = vperm.xlu0 %375, %v358
        %v377 = vpop.permute.xlu0 %376
        %v379 = vlaneseq
        %v380 = vshrl.u32 %v379, 7
        %v381 = vsub.s32 0, %v380
        %v382 = vrot.slane %v352, %v381
        %v383 = vlaneseq
        %v384 = vshrl.u32 %v383, 7
        %v385 = vsub.s32 0, %v384
        %v386 = vrot.slane %v354, %v385
        %v387 = vadd.f32 %v362, %v382
        %v388 = vadd.f32 %v362, %v386
        %v389 = vadd.f32 %v367, %v382
        %v390 = vadd.f32 %v367, %v386
        %v391 = vadd.f32 %v372, %v382
        %v392 = vadd.f32 %v372, %v386
        %v393 = vadd.f32 %v377, %v382
        %v394 = vadd.f32 %v377, %v386
        %v395 = vmul.f32 %v257, %v387
        %v396 = vmul.f32 %v258, %v388
        %v397 = vmul.f32 %v259, %v389
        %v398 = vmul.f32 %v260, %v390
        %v399 = vmul.f32 %v261, %v391
        %v400 = vmul.f32 %v262, %v392
        %v401 = vmul.f32 %v263, %v393
        %v402 = vmul.f32 %v264, %v394
        %403 = vst [vmem:[%s249] sm:$0xff] %v395
        %404 = vst [vmem:[%s249 + $0x8] sm:$0xff] %v396
        %405 = vst [vmem:[%s249 + $0x10] sm:$0xff] %v397
        %406 = vst [vmem:[%s249 + $0x18] sm:$0xff] %v398
        %407 = vst [vmem:[%s249 + $0x20] sm:$0xff] %v399
        %408 = vst [vmem:[%s249 + $0x28] sm:$0xff] %v400
        %409 = vst [vmem:[%s249 + $0x30] sm:$0xff] %v401
        %410 = vst [vmem:[%s249 + $0x38] sm:$0xff] %v402
        %s411 = sand.u32 %s140, 1
        %s412 = scalar_lea.sflag [#allocation5], %s411
        %s413 = sand.u32 %s140, 1
        %s414 = smul.addr %s413, 64
        %s415 = scalar_lea.vmem [#allocation6], %s414
        // Predicated region
        $region41: #{tpu_custom_call.1} parent=35 // pred_check
          %p416 = pneg %p150
        $region42: #{tpu_custom_call.1} parent=35 // pred_check_branch
          %418 = sbr.rel (%p416) target = $region44
        $region43: #{tpu_custom_call.1} parent=35 // pred_region
          %s419 = smul.u32 2, %s27
          %s421 = ssub.s32 1024, 1024
          %422 = vsyncadd %s412, %s421
          %s423 = smul.addr %s26, 8
          %s424 = sadd.s32 %s419, %s423
          %s425 = smul.addr %s424, 128
          %s426 = scalar_lea.hbm %s4, %s425
          %s427 = sshll.u32 %s415, 4
          %s428 = int_to_ptr.vmem [resolvable:$true] %s427
          %433 = dma.vmem_to_hbm [thread:$0]  %s428, 1024, %s426, %s412, 256, 256, 16
        $region44: #{tpu_custom_call.1} parent=35 // pred_fallthru
          _
      $region36: #{tpu_custom_call.1} parent=5 // pred_fallthru
        _
      %p434 = scmp.le.s32.totalorder 2, %s17
      // Predicated region
      $region45: #{tpu_custom_call.1} parent=5 // pred_check
        %p435 = pneg %p434
      $region46: #{tpu_custom_call.1} parent=5 // pred_check_branch
        %437 = sbr.rel (%p435) target = $region48
      $region47: #{tpu_custom_call.1} parent=5 // pred_region
        %s438 = ssub.s32 %s17, 2
        // Predicated region
        $region49: #{tpu_custom_call.1} parent=47 // pred_check
          %p439 = pneg %p156
        $region50: #{tpu_custom_call.1} parent=47 // pred_check_branch
          %441 = sbr.rel (%p439) target = $region52
        $region51: #{tpu_custom_call.1} parent=47 // pred_region
          %s442 = sand.u32 %s141, 1
          %s443 = scalar_lea.sflag [#allocation5], %s442
          %s444 = sand.u32 %s141, 1
          %s445 = smul.addr %s444, 64
          %s446 = scalar_lea.vmem [#allocation6], %s445
          %447 = dma.done %s443, 1024
        $region52: #{tpu_custom_call.1} parent=47 // pred_fallthru
          _
      $region48: #{tpu_custom_call.1} parent=5 // pred_fallthru
        _
    $region6: #{tpu_custom_call.1} parent=1 // loop_footer
      %s21 = sadd.s32 1, %s17
    $region7: #{tpu_custom_call.1} parent=1 // loop_footer_branch
      %16 = sbr.rel target = $region3
    $region8: #{tpu_custom_call.1} parent=1 // loop_exit
      _
    %448 = vsyncpa [#allocation4], 1
    %s449 = scalar_lea.sflag [#allocation4], 1
    %450 = vsyncpa %s449, 1
    %451 = vsyncpa [#allocation5], 1
    %s452 = scalar_lea.sflag [#allocation5], 1
    %453 = vsyncpa %s452, 1

</llo_original>
